<compile_context>
chip_gen: v5e
topology: v5e:2x2
jax: 0.10.0
libtpu: 0.0.40
codegen_flags: <defaults>
</compile_context>

<pallas_src>
import inspect
import math

import jax
import jax.numpy as jnp
from jax.experimental import pallas as pl
from jax.experimental.pallas import tpu as pltpu


_INV_SQRT2 = 1.0 / math.sqrt(2.0)
_SQRT_2_OVER_PI = math.sqrt(2.0 / math.pi)


def _gelu_exact(x):
    # PyTorch nn.GELU() default: 0.5 * x * (1 + erf(x / sqrt(2))), computed in f32.
    return 0.5 * x * (1.0 + jax.lax.erf(x * _INV_SQRT2))


def _gelu_tanh(x):
    # PyTorch nn.GELU(approximate="tanh"); tanh rides the EUP slot instead of the
    # VALU erf polynomial.  Opt-in (slightly different numerics).
    return 0.5 * x * (1.0 + jnp.tanh(_SQRT_2_OVER_PI * (x + 0.044715 * x * x * x)))


def _round_up(x, m):
    return ((x + m - 1) // m) * m


def _supports_single_buffered_blockspec():
    # Explicit feature check for BlockSpec(pipeline_mode=pl.Buffered(...)).
    if not hasattr(pl, "Buffered"):
        return False
    try:
        return "pipeline_mode" in inspect.signature(pl.BlockSpec).parameters
    except (TypeError, ValueError):
        return False


def _make_kernel(approx_gelu):
    act = _gelu_tanh if approx_gelu else _gelu_exact

    def kernel(x_ref, w1_ref, b1_ref, w2_ref, b2_ref, w3_ref, b3_ref, o_ref):
        # Layer 1: (tm, P) @ (P, F).  x cast to the weight dtype (bf16 by default)
        # right before the dot; accumulation is f32 on the MXU.
        h = jnp.dot(x_ref[...].astype(w1_ref.dtype), w1_ref[...],
                    preferred_element_type=jnp.float32)
        h = act(h + b1_ref[...])
        # Layer 2
        h = jnp.dot(h.astype(w2_ref.dtype), w2_ref[...],
                    preferred_element_type=jnp.float32)
        h = act(h + b2_ref[...])
        # Layer 3 (no activation)
        h = jnp.dot(h.astype(w3_ref.dtype), w3_ref[...],
                    preferred_element_type=jnp.float32)
        o_ref[...] = (h + b3_ref[...]).astype(o_ref.dtype)

    return kernel


def _choose_row_tile(m_rows, row_align):
    m_al = _round_up(max(int(m_rows), 1), row_align)
    tm = min(1024, m_al)
    # Split into >=2 grid steps only when each half remains a healthy MXU tile
    # (>=256 rows): helps v7x's two TensorCores, would be pure per-step overhead
    # on v5e/v6e at small M.
    if m_al // tm < 2 and m_al >= 512:
        tm = _round_up(pl.cdiv(m_al, 2), row_align)
    return tm


def init_pose_embedding_params(key, pose_dim, feature_dim):
    """nn.Linear-style init: U(-1/sqrt(fan_in), 1/sqrt(fan_in)) for W and b.
    Weights stored as (in, out) -- transpose of PyTorch's (out, in) -- unpadded."""
    ks = jax.random.split(key, 6)

    def lin(kw, kb, fin, fout):
        bnd = 1.0 / math.sqrt(fin)
        w = jax.random.uniform(kw, (fin, fout), jnp.float32, -bnd, bnd)
        b = jax.random.uniform(kb, (1, fout), jnp.float32, -bnd, bnd)
        return w, b

    w1, b1 = lin(ks[0], ks[1], pose_dim, feature_dim)
    w2, b2 = lin(ks[2], ks[3], feature_dim, feature_dim)
    w3, b3 = lin(ks[4], ks[5], feature_dim, feature_dim)
    return {
        "pose_dim": pose_dim, "feature_dim": feature_dim,
        "w1": w1, "b1": b1, "w2": w2, "b2": b2, "w3": w3, "b3": b3,
    }


def pose_embedding_forward(params, x, *, use_bf16=True, approx_gelu=False):
    """PoseEmbedding.forward: x (..., pose_dim) -> (..., feature_dim)."""
    pose_dim = int(params["pose_dim"])
    feat = int(params["feature_dim"])
    assert x.shape[-1] == pose_dim
    w1, b1, w2, b2, w3, b3 = (params[k] for k in ("w1", "b1", "w2", "b2", "w3", "b3"))

    lead_shape = x.shape[:-1]
    m_rows = math.prod(lead_shape) if lead_shape else 1
    x2d = x.reshape(m_rows, pose_dim)
    if x2d.dtype not in (jnp.float32, jnp.bfloat16):
        x2d = x2d.astype(jnp.float32)

    if use_bf16:
        # bf16 matmul operands: native MXU format on every generation; halves weight
        # DMA and resident-weight VMEM.  f32 accumulation + f32 GELU/bias preserved.
        w1, w2, w3 = (w.astype(jnp.bfloat16) for w in (w1, w2, w3))

    row_align = 16 if (use_bf16 or x2d.dtype == jnp.bfloat16) else 8
    tm = _choose_row_tile(m_rows, row_align)
    grid_m = int(pl.cdiv(m_rows, tm))

    x_b = x2d.dtype.itemsize
    w_b = w1.dtype.itemsize
    single_buffer = (
        _supports_single_buffered_blockspec()
        and 2 * (pose_dim * feat + 2 * feat * feat) * w_b > (16 << 20)
    )

    def _resident_spec(shape):
        if single_buffer:
            # Same block every grid step -> one buffer suffices (halves weight VMEM).
            return pl.BlockSpec(shape, lambda i: (0, 0), pipeline_mode=pl.Buffered(1))
        return pl.BlockSpec(shape, lambda i: (0, 0))

    # VMEM budget: weights (+biases), double-buffered x/out tiles, and the
    # compiler-materialized (tm, feat) f32 intermediates (+ bf16 casts).
    # TODO(synk): for feature_dim >= ~2048 on v7x (64 MiB VMEM) add an N-tiled grid
    # axis over w2/w3 columns instead of keeping all three weights resident.
    wbuf = 1 if single_buffer else 2
    weight_bytes = wbuf * ((pose_dim * feat + 2 * feat * feat) * w_b + 3 * feat * 4)
    io_bytes = 2 * tm * (pose_dim * x_b + feat * 4)
    interm_bytes = 3 * tm * feat * 4
    vmem_limit = int(min(max(weight_bytes + io_bytes + interm_bytes + (8 << 20),
                             32 << 20), 48 << 20))

    # Cost estimate based on the shapes actually executed (no padding).
    cost = pl.CostEstimate(
        flops=int(2 * m_rows * (pose_dim * feat + 2 * feat * feat)),
        transcendentals=int(2 * m_rows * feat),
        bytes_accessed=int(
            x2d.size * x_b
            + sum(a.size * a.dtype.itemsize for a in (w1, b1, w2, b2, w3, b3))
            + m_rows * feat * 4
        ),
    )

    fn = pl.pallas_call(
        _make_kernel(approx_gelu),
        out_shape=jax.ShapeDtypeStruct((m_rows, feat), jnp.float32),
        grid_spec=pltpu.PrefetchScalarGridSpec(
            num_scalar_prefetch=0,
            grid=(grid_m,),
            in_specs=[
                pl.BlockSpec((tm, pose_dim), lambda i: (i, 0)),  # streamed x row tile
                _resident_spec((pose_dim, feat)),                # w1
                _resident_spec((1, feat)),                       # b1
                _resident_spec((feat, feat)),                    # w2
                _resident_spec((1, feat)),                       # b2
                _resident_spec((feat, feat)),                    # w3
                _resident_spec((1, feat)),                       # b3
            ],
            out_specs=pl.BlockSpec((tm, feat), lambda i: (i, 0)),  # true-width output
        ),
        compiler_params=pltpu.CompilerParams(
            dimension_semantics=("parallel",),
            vmem_limit_bytes=vmem_limit,
        ),
        cost_estimate=cost,
    )

    out2d = fn(x2d, w1, b1, w2, b2, w3, b3)
    return out2d.reshape(*lead_shape, feat)


if __name__ == "__main__":
    # Small shapes consistent with the module: x is (batch, seq, pose_dim).
    batch, seq = 2, 8
    pose_dim, feature_dim = 24, 32

    root = jax.random.PRNGKey(0)
    k_params, k_x = jax.random.split(root)
    params = init_pose_embedding_params(k_params, pose_dim, feature_dim)
    x = jax.random.normal(k_x, (batch, seq, pose_dim), jnp.float32)

    # Plain-JAX reference (exact-erf GELU, f32 everywhere).
    def ref(params, x):
        h = _gelu_exact(x @ params["w1"] + params["b1"][0])
        h = _gelu_exact(h @ params["w2"] + params["b2"][0])
        return h @ params["w3"] + params["b3"][0]

    expect = ref(params, x)

    # f32 matmul path: tight tolerance against the reference.
    out_f32 = pose_embedding_forward(params, x, use_bf16=False)
    jax.block_until_ready(out_f32)
    assert out_f32.shape == (batch, seq, feature_dim)
    assert jnp.allclose(out_f32, expect, atol=1e-5), float(jnp.max(jnp.abs(out_f32 - expect)))

    # Default path: bf16 matmul operands, f32 accumulation + f32 GELU/bias.
    out = pose_embedding_forward(params, x)
    jax.block_until_ready(out)
    assert out.shape == (batch, seq, feature_dim)
    assert jnp.allclose(out, expect, atol=5e-2, rtol=5e-2), float(jnp.max(jnp.abs(out - expect)))

    # Opt-in tanh-approx GELU path (EUP tanh): loose tolerance vs exact-erf reference.
    out_tanh = pose_embedding_forward(params, x, approx_gelu=True)
    jax.block_until_ready(out_tanh)
    assert jnp.allclose(out_tanh, expect, atol=5e-2, rtol=5e-2)

    print("KERNEL_OK")
</pallas_src>

<mosaic_0001>
module attributes {stable_mosaic.version = 11 : i64} {
  func.func @kernel(%arg0: i32, %arg1: memref<16x24xf32, #tpu.memory_space<vmem>>, %arg2: memref<24x32xf32, #tpu.memory_space<vmem>>, %arg3: memref<1x32xf32, #tpu.memory_space<vmem>>, %arg4: memref<32x32xf32, #tpu.memory_space<vmem>>, %arg5: memref<1x32xf32, #tpu.memory_space<vmem>>, %arg6: memref<32x32xf32, #tpu.memory_space<vmem>>, %arg7: memref<1x32xf32, #tpu.memory_space<vmem>>, %arg8: memref<16x32xf32, #tpu.memory_space<vmem>>) attributes {dimension_semantics = [#tpu.dimension_semantics<parallel>], iteration_bounds = array<i64: 1>, scalar_prefetch = 0 : i64, scratch_operands = 0 : i64, tpu.core_type = #tpu.core_type<tc>, window_params = [{transform_indices = @transform_0, window_bounds = array<i64: 16, 24>}, {pipeline_mode = #tpu.pipeline_mode<synchronous>, transform_indices = @transform_1, window_bounds = array<i64: 24, 32>}, {pipeline_mode = #tpu.pipeline_mode<synchronous>, transform_indices = @transform_2, window_bounds = array<i64: 1, 32>}, {pipeline_mode = #tpu.pipeline_mode<synchronous>, transform_indices = @transform_3, window_bounds = array<i64: 32, 32>}, {pipeline_mode = #tpu.pipeline_mode<synchronous>, transform_indices = @transform_4, window_bounds = array<i64: 1, 32>}, {pipeline_mode = #tpu.pipeline_mode<synchronous>, transform_indices = @transform_5, window_bounds = array<i64: 32, 32>}, {pipeline_mode = #tpu.pipeline_mode<synchronous>, transform_indices = @transform_6, window_bounds = array<i64: 1, 32>}, {transform_indices = @transform_7, window_bounds = array<i64: 16, 32>}]} {
    %c0 = arith.constant 0 : index
    %c0_0 = arith.constant 0 : index
    %0 = vector.load %arg1[%c0, %c0_0] : memref<16x24xf32, #tpu.memory_space<vmem>>, vector<16x24xf32>
    %c0_1 = arith.constant 0 : index
    %c0_2 = arith.constant 0 : index
    %1 = vector.load %arg2[%c0_1, %c0_2] : memref<24x32xf32, #tpu.memory_space<vmem>>, vector<24x32xf32>
    %cst = arith.constant dense<0.000000e+00> : vector<16x32xf32>
    %2 = tpu.matmul %0, %1, %cst {dimension_numbers = #tpu.dot_dimension_numbers<[1], [0], [0], [1], [0, 0, 1, 1], [], []>} : vector<16x24xf32>, vector<24x32xf32>, vector<16x32xf32> -> vector<16x32xf32>
    %c0_3 = arith.constant 0 : index
    %c0_4 = arith.constant 0 : index
    %3 = vector.load %arg3[%c0_3, %c0_4] : memref<1x32xf32, #tpu.memory_space<vmem>>, vector<1x32xf32>
    %4 = vector.broadcast %3 : vector<1x32xf32> to vector<16x32xf32>
    %5 = arith.addf %2, %4 : vector<16x32xf32>
    %cst_5 = arith.constant 5.000000e-01 : f32
    %6 = vector.broadcast %cst_5 : f32 to vector<16x32xf32>
    %7 = arith.mulf %6, %5 : vector<16x32xf32>
    %cst_6 = arith.constant 0.707106769 : f32
    %8 = vector.broadcast %cst_6 : f32 to vector<16x32xf32>
    %9 = arith.mulf %5, %8 : vector<16x32xf32>
    %10 = math.erf %9 : vector<16x32xf32>
    %cst_7 = arith.constant 1.000000e+00 : f32
    %11 = vector.broadcast %cst_7 : f32 to vector<16x32xf32>
    %12 = arith.addf %11, %10 : vector<16x32xf32>
    %13 = arith.mulf %7, %12 : vector<16x32xf32>
    %c0_8 = arith.constant 0 : index
    %c0_9 = arith.constant 0 : index
    %14 = vector.load %arg4[%c0_8, %c0_9] : memref<32x32xf32, #tpu.memory_space<vmem>>, vector<32x32xf32>
    %cst_10 = arith.constant dense<0.000000e+00> : vector<16x32xf32>
    %15 = tpu.matmul %13, %14, %cst_10 {dimension_numbers = #tpu.dot_dimension_numbers<[1], [0], [0], [1], [0, 0, 1, 1], [], []>} : vector<16x32xf32>, vector<32x32xf32>, vector<16x32xf32> -> vector<16x32xf32>
    %c0_11 = arith.constant 0 : index
    %c0_12 = arith.constant 0 : index
    %16 = vector.load %arg5[%c0_11, %c0_12] : memref<1x32xf32, #tpu.memory_space<vmem>>, vector<1x32xf32>
    %17 = vector.broadcast %16 : vector<1x32xf32> to vector<16x32xf32>
    %18 = arith.addf %15, %17 : vector<16x32xf32>
    %cst_13 = arith.constant 5.000000e-01 : f32
    %19 = vector.broadcast %cst_13 : f32 to vector<16x32xf32>
    %20 = arith.mulf %19, %18 : vector<16x32xf32>
    %cst_14 = arith.constant 0.707106769 : f32
    %21 = vector.broadcast %cst_14 : f32 to vector<16x32xf32>
    %22 = arith.mulf %18, %21 : vector<16x32xf32>
    %23 = math.erf %22 : vector<16x32xf32>
    %cst_15 = arith.constant 1.000000e+00 : f32
    %24 = vector.broadcast %cst_15 : f32 to vector<16x32xf32>
    %25 = arith.addf %24, %23 : vector<16x32xf32>
    %26 = arith.mulf %20, %25 : vector<16x32xf32>
    %c0_16 = arith.constant 0 : index
    %c0_17 = arith.constant 0 : index
    %27 = vector.load %arg6[%c0_16, %c0_17] : memref<32x32xf32, #tpu.memory_space<vmem>>, vector<32x32xf32>
    %cst_18 = arith.constant dense<0.000000e+00> : vector<16x32xf32>
    %28 = tpu.matmul %26, %27, %cst_18 {dimension_numbers = #tpu.dot_dimension_numbers<[1], [0], [0], [1], [0, 0, 1, 1], [], []>} : vector<16x32xf32>, vector<32x32xf32>, vector<16x32xf32> -> vector<16x32xf32>
    %c0_19 = arith.constant 0 : index
    %c0_20 = arith.constant 0 : index
    %29 = vector.load %arg7[%c0_19, %c0_20] : memref<1x32xf32, #tpu.memory_space<vmem>>, vector<1x32xf32>
    %30 = vector.broadcast %29 : vector<1x32xf32> to vector<16x32xf32>
    %31 = arith.addf %28, %30 : vector<16x32xf32>
    %c0_21 = arith.constant 0 : index
    %c0_22 = arith.constant 0 : index
    %32 = vector.load %arg8[%c0_21, %c0_22] : memref<16x32xf32, #tpu.memory_space<vmem>>, vector<16x32xf32>
    tpu.vector_store %arg8[%c0_21, %c0_22], %31 {strides = array<i32>} : memref<16x32xf32, #tpu.memory_space<vmem>>, vector<16x32xf32>,
    return
  }
  func.func @transform_0(%arg0: i32) -> (i32, i32) {
    %c0_i32 = arith.constant 0 : i32
    %c0_i32_0 = arith.constant 0 : i32
    return %arg0, %c0_i32 : i32, i32
  }
  func.func @transform_1(%arg0: i32) -> (i32, i32) {
    %c0_i32 = arith.constant 0 : i32
    %c0_i32_0 = arith.constant 0 : i32
    %c0_i32_1 = arith.constant 0 : i32
    return %c0_i32, %c0_i32_0 : i32, i32
  }
  func.func @transform_2(%arg0: i32) -> (i32, i32) {
    %c0_i32 = arith.constant 0 : i32
    %c0_i32_0 = arith.constant 0 : i32
    %c0_i32_1 = arith.constant 0 : i32
    return %c0_i32, %c0_i32_0 : i32, i32
  }
  func.func @transform_3(%arg0: i32) -> (i32, i32) {
    %c0_i32 = arith.constant 0 : i32
    %c0_i32_0 = arith.constant 0 : i32
    %c0_i32_1 = arith.constant 0 : i32
    return %c0_i32, %c0_i32_0 : i32, i32
  }
  func.func @transform_4(%arg0: i32) -> (i32, i32) {
    %c0_i32 = arith.constant 0 : i32
    %c0_i32_0 = arith.constant 0 : i32
    %c0_i32_1 = arith.constant 0 : i32
    return %c0_i32, %c0_i32_0 : i32, i32
  }
  func.func @transform_5(%arg0: i32) -> (i32, i32) {
    %c0_i32 = arith.constant 0 : i32
    %c0_i32_0 = arith.constant 0 : i32
    %c0_i32_1 = arith.constant 0 : i32
    return %c0_i32, %c0_i32_0 : i32, i32
  }
  func.func @transform_6(%arg0: i32) -> (i32, i32) {
    %c0_i32 = arith.constant 0 : i32
    %c0_i32_0 = arith.constant 0 : i32
    %c0_i32_1 = arith.constant 0 : i32
    return %c0_i32, %c0_i32_0 : i32, i32
  }
  func.func @transform_7(%arg0: i32) -> (i32, i32) {
    %c0_i32 = arith.constant 0 : i32
    %c0_i32_0 = arith.constant 0 : i32
    return %arg0, %c0_i32 : i32, i32
  }
}

</mosaic_0001>

<llo_original>
// kernel: tpu_custom_call.1
$region0: #{tpu_custom_call.1}
  #allocation0 [shape = 'u32[]', space=smem, size = 0x4, offset = 0x4, fixed_abs, tag = 'smem constant byte address 0x4 - core index']
  #allocation1 [shape = 'u32[72,128]{1,0:T(1,128)}', space=vmem, size = 0x9000, scoped, tag = 'internal scratch']
  %s0 = inlined_call_operand.hbm [shape: f32[16,24], index: 0, kind: input, shape index: {}]
  %s1 = inlined_call_operand.hbm [shape: f32[24,32], index: 1, kind: input, shape index: {}]
  %s2 = inlined_call_operand.vmem [shape: f32[1,32], index: 2, kind: input, shape index: {}]
  %s3 = inlined_call_operand.hbm [shape: f32[32,32], index: 3, kind: input, shape index: {}]
  %s4 = inlined_call_operand.vmem [shape: f32[1,32], index: 4, kind: input, shape index: {}]
  %s5 = inlined_call_operand.hbm [shape: f32[32,32], index: 5, kind: input, shape index: {}]
  %s6 = inlined_call_operand.vmem [shape: f32[1,32], index: 6, kind: input, shape index: {}]
  %s7 = inlined_call_operand.hbm [shape: f32[16,32], index: 7, kind: output, shape index: {}]
  %s8 = sld [smem:[#allocation0]]
  $region54: #{tpu_custom_call.1} parent=0
    _
  %s10 = ssub.s32 1, %s8
  %s11 = scalar_select 0, %s10, %s8
  $region1: #{tpu_custom_call.1} parent=0
    #allocation2 [shape = 'u8[8192]{0}', space=vmem, size = 0x2000, scoped, tag = 'input window, operand 0, single buffered']
    #allocation3 [shape = 's32[1]{0}', space=sflag, size = 0x4, scoped, tag = 'scoped memory for tpu_custom_call.1']
    #allocation4 [shape = 's32[1]{0}', space=sflag, size = 0x4, scoped, tag = 'scoped memory for tpu_custom_call.1']
    #allocation5 [shape = 'u8[12288]{0}', space=vmem, size = 0x3000, scoped, tag = 'input window, operand 1, single buffered']
    #allocation6 [shape = 's32[1]{0}', space=sflag, size = 0x4, scoped, tag = 'scoped memory for tpu_custom_call.1']
    #allocation7 [shape = 'u8[16384]{0}', space=vmem, size = 0x4000, scoped, tag = 'input window, operand 3, single buffered']
    #allocation8 [shape = 'u8[16384]{0}', space=vmem, size = 0x4000, scoped, tag = 'input window, operand 5, single buffered']
    #allocation9 [shape = 's32[1]{0}', space=sflag, size = 0x4, scoped, tag = 'scoped memory for tpu_custom_call.1']
    #allocation10 [shape = 'u8[8192]{0}', space=vmem, size = 0x2000, scoped, tag = 'output window, operand 0, single buffered']
    %12 = vsyncpa [#allocation3], 0
    %13 = vsyncpa [#allocation6], 0
    %14 = vsyncpa [#allocation9], 0
    %15 = vsyncpa [#allocation4], 0
    // Predicated region
    $region2: #{tpu_custom_call.1} parent=1 // pred_check
      _
    $region3: #{tpu_custom_call.1} parent=1 // pred_check_branch
      %17 = sbr.rel (0) target = $region5
    $region4: #{tpu_custom_call.1} parent=1 // pred_region
      %19 = vsyncadd [#allocation3], 0
      %s20 = sshll.u32 %s0, 4
      %s21 = int_to_ptr.hbm [resolvable:$true] %s20
      %s22 = sshll.u32 [#allocation2], 4
      %s23 = int_to_ptr.vmem [resolvable:$true] %s22
      %28 = dma.hbm_to_vmem [thread:$0]  %s21, 256, %s23, [#allocation3], 128, 128, 8
    $region5: #{tpu_custom_call.1} parent=1 // pred_fallthru
      _
    // Predicated region
    $region6: #{tpu_custom_call.1} parent=1 // pred_check
      _
    $region7: #{tpu_custom_call.1} parent=1 // pred_check_branch
      %30 = sbr.rel (0) target = $region9
    $region8: #{tpu_custom_call.1} parent=1 // pred_region
      %32 = vsyncadd [#allocation6], 0
      %s33 = sshll.u32 %s1, 4
      %s34 = int_to_ptr.hbm [resolvable:$true] %s33
      %s35 = sshll.u32 [#allocation5], 4
      %s36 = int_to_ptr.vmem [resolvable:$true] %s35
      %41 = dma.hbm_to_vmem [thread:$0]  %s34, 384, %s36, [#allocation6], 128, 128, 8
    $region9: #{tpu_custom_call.1} parent=1 // pred_fallthru
      _
    // Predicated region
    $region10: #{tpu_custom_call.1} parent=1 // pred_check
      _
    $region11: #{tpu_custom_call.1} parent=1 // pred_check_branch
      %43 = sbr.rel (0) target = $region13
    $region12: #{tpu_custom_call.1} parent=1 // pred_region
      _
    $region13: #{tpu_custom_call.1} parent=1 // pred_fallthru
      _
    // Predicated region
    $region14: #{tpu_custom_call.1} parent=1 // pred_check
      _
    $region15: #{tpu_custom_call.1} parent=1 // pred_check_branch
      %45 = sbr.rel (0) target = $region17
    $region16: #{tpu_custom_call.1} parent=1 // pred_region
      %47 = vsyncadd [#allocation6], 0
      %s48 = sshll.u32 %s3, 4
      %s49 = int_to_ptr.hbm [resolvable:$true] %s48
      %s50 = sshll.u32 [#allocation7], 4
      %s51 = int_to_ptr.vmem [resolvable:$true] %s50
      %56 = dma.hbm_to_vmem [thread:$0]  %s49, 512, %s51, [#allocation6], 128, 128, 8
    $region17: #{tpu_custom_call.1} parent=1 // pred_fallthru
      _
    // Predicated region
    $region18: #{tpu_custom_call.1} parent=1 // pred_check
      _
    $region19: #{tpu_custom_call.1} parent=1 // pred_check_branch
      %58 = sbr.rel (0) target = $region21
    $region20: #{tpu_custom_call.1} parent=1 // pred_region
      _
    $region21: #{tpu_custom_call.1} parent=1 // pred_fallthru
      _
    // Predicated region
    $region22: #{tpu_custom_call.1} parent=1 // pred_check
      _
    $region23: #{tpu_custom_call.1} parent=1 // pred_check_branch
      %60 = sbr.rel (0) target = $region25
    $region24: #{tpu_custom_call.1} parent=1 // pred_region
      %62 = vsyncadd [#allocation9], 0
      %s63 = sshll.u32 %s5, 4
      %s64 = int_to_ptr.hbm [resolvable:$true] %s63
      %s65 = sshll.u32 [#allocation8], 4
      %s66 = int_to_ptr.vmem [resolvable:$true] %s65
      %71 = dma.hbm_to_vmem [thread:$0]  %s64, 512, %s66, [#allocation9], 128, 128, 8
    $region25: #{tpu_custom_call.1} parent=1 // pred_fallthru
      _
    // Predicated region
    $region26: #{tpu_custom_call.1} parent=1 // pred_check
      _
    $region27: #{tpu_custom_call.1} parent=1 // pred_check_branch
      %73 = sbr.rel (0) target = $region29
    $region28: #{tpu_custom_call.1} parent=1 // pred_region
      _
    $region29: #{tpu_custom_call.1} parent=1 // pred_fallthru
      _
    // Predicated region
    $region30: #{tpu_custom_call.1} parent=1 // pred_check
      _
    $region31: #{tpu_custom_call.1} parent=1 // pred_check_branch
      %75 = sbr.rel (0) target = $region33
    $region32: #{tpu_custom_call.1} parent=1 // pred_region
      %77 = dma.done [#allocation3], 256
    $region33: #{tpu_custom_call.1} parent=1 // pred_fallthru
      _
    // Predicated region
    $region34: #{tpu_custom_call.1} parent=1 // pred_check
      _
    $region35: #{tpu_custom_call.1} parent=1 // pred_check_branch
      %79 = sbr.rel (0) target = $region37
    $region36: #{tpu_custom_call.1} parent=1 // pred_region
      %81 = dma.done [#allocation6], 384
    $region37: #{tpu_custom_call.1} parent=1 // pred_fallthru
      _
    // Predicated region
    $region38: #{tpu_custom_call.1} parent=1 // pred_check
      _
    $region39: #{tpu_custom_call.1} parent=1 // pred_check_branch
      %83 = sbr.rel (0) target = $region41
    $region40: #{tpu_custom_call.1} parent=1 // pred_region
      %85 = dma.done [#allocation6], 512
    $region41: #{tpu_custom_call.1} parent=1 // pred_fallthru
      _
    // Predicated region
    $region42: #{tpu_custom_call.1} parent=1 // pred_check
      _
    $region43: #{tpu_custom_call.1} parent=1 // pred_check_branch
      %87 = sbr.rel (0) target = $region45
    $region44: #{tpu_custom_call.1} parent=1 // pred_region
      %89 = dma.done [#allocation9], 512
    $region45: #{tpu_custom_call.1} parent=1 // pred_fallthru
      _
    %v90 = vld [vmem:[#allocation2] sm:$0xff]
    %v91 = vld [vmem:[#allocation2 + $0x8] sm:$0xff]
    %v92 = vld [vmem:[#allocation5] sm:$0xff]
    %v93 = vld [vmem:[#allocation5 + $0x8] sm:$0xff]
    %v94 = vld [vmem:[#allocation5 + $0x10] sm:$0xff]
    %v95 = vld [vmem:[%s2] sm:$0x1]
    %v97 = vperm.slane %v95, 0
    %vm99 = vcmask 195584
    %v101 = vsel %vm99, %v90, 0
    %v104 = vsel %vm99, %v91, 0
    %106 = vmatpush.msra.mxu0 0.0
    %107 = vmatpush.msra.mxu0 0.0
    %108 = vmatpush.msra.mxu0 0.0
    %109 = vmatpush.msra.mxu0 0.0
    %110 = vmatpush.msra.mxu0 0.0
    %111 = vmatpush.msra.mxu0 0.0
    %112 = vmatpush.msra.mxu0 0.0
    %113 = vmatpush.msra.mxu0 0.0
    %114 = vmatpush.msra.mxu0 0.0
    %115 = vmatpush.msra.mxu0 0.0
    %116 = vmatpush.msra.mxu0 0.0
    %117 = vmatpush.msra.mxu0 0.0
    %118 = vmatpush.msra.mxu0 0.0
    %119 = vmatpush.msra.mxu0 %v94
    %120 = vmatpush.msra.mxu0 %v93
    %121 = vmatpush.msra.mxu0 %v92
    %122 = vmatmul.f32.gmra.mxu0 %v101
    %v123 = vpop.f32.mrf.mxu0
    %v124 = vadd.f32 %v97, %v123
    %125 = vmatmul.f32.gmra.mxu0 %v104
    %v126 = vpop.f32.mrf.mxu0
    %v127 = vadd.f32 %v97, %v126
    %128 = vdwg.mxu0
    %v129 = vmul.f32 %v124, 0.5
    %v130 = vmul.f32 %v127, 0.5
    %v131 = vmul.f32 %v124, 0.70710677
    %v132 = vmul.f32 %v127, 0.70710677
    %v133 = vmul.f32 %v131, %v131
    %v134 = vmin.f32 16.0, %v133
    %v135 = vmul.f32 %v134, 2.1237322e-06
    %v136 = vadd.f32 %v135, 0.00028619796
    %v137 = vmul.f32 %v134, %v136
    %v138 = vadd.f32 %v137, 0.0036580483
    %v139 = vmul.f32 %v134, %v138
    %v140 = vadd.f32 %v139, 0.05243302
    %v141 = vmul.f32 %v134, %v140
    %v142 = vadd.f32 %v141, 0.18741608
    %v143 = vmul.f32 %v134, %v142
    %v144 = vadd.f32 %v143, 1.1283791
    %v145 = vmul.f32 %v131, %v144
    %v146 = vmul.f32 %v134, 3.8918573e-05
    %v147 = vadd.f32 %v146, 0.001143296
    %v148 = vmul.f32 %v134, %v147
    %v149 = vadd.f32 %v148, 0.014752088
    %v150 = vmul.f32 %v134, %v149
    %v151 = vadd.f32 %v150, 0.112945676
    %v152 = vmul.f32 %v134, %v151
    %v153 = vadd.f32 %v152, 0.4994258
    %v154 = vmul.f32 %v134, %v153
    %v155 = vadd.f32 %v154, 1.0
    %v156 = vrcp.pop %v155
    %v157 = vmul.f32 %v155, %v156
    %v158 = vsub.f32 1.0, %v157
    %v159 = vmul.f32 %v156, %v158
    %v160 = vadd.f32 %v156, %v159
    %vm161 = vweird.f32 %v155
    %vm162 = vweird.f32 %v156
    %vm163 = vmor %vm161, %vm162
    %v164 = vsel %vm163, %v156, %v160
    %v165 = vand.u32 2147483647, %v155
    %vm166 = vcmp.eq.f32.partialorder %v165, 8.507059e+37
    %v167 = vand.u32 %v155, 2147483648
    %v168 = vor.u32 1.1754944e-38, %v167
    %v169 = vsel %vm166, %v168, %v164
    %v170 = vmul.f32 %v145, %v169
    %v171 = vmin.f32 %v170, 1.0
    %v172 = vmax.f32 %v171, -1.0
    %v173 = vmul.f32 %v132, %v132
    %v174 = vmin.f32 16.0, %v173
    %v175 = vmul.f32 %v174, 2.1237322e-06
    %v176 = vadd.f32 %v175, 0.00028619796
    %v177 = vmul.f32 %v174, %v176
    %v178 = vadd.f32 %v177, 0.0036580483
    %v179 = vmul.f32 %v174, %v178
    %v180 = vadd.f32 %v179, 0.05243302
    %v181 = vmul.f32 %v174, %v180
    %v182 = vadd.f32 %v181, 0.18741608
    %v183 = vmul.f32 %v174, %v182
    %v184 = vadd.f32 %v183, 1.1283791
    %v185 = vmul.f32 %v132, %v184
    %v186 = vmul.f32 %v174, 3.8918573e-05
    %v187 = vadd.f32 %v186, 0.001143296
    %v188 = vmul.f32 %v174, %v187
    %v189 = vadd.f32 %v188, 0.014752088
    %v190 = vmul.f32 %v174, %v189
    %v191 = vadd.f32 %v190, 0.112945676
    %v192 = vmul.f32 %v174, %v191
    %v193 = vadd.f32 %v192, 0.4994258
    %v194 = vmul.f32 %v174, %v193
    %v195 = vadd.f32 %v194, 1.0
    %v196 = vrcp.pop %v195
    %v197 = vmul.f32 %v195, %v196
    %v198 = vsub.f32 1.0, %v197
    %v199 = vmul.f32 %v196, %v198
    %v200 = vadd.f32 %v196, %v199
    %vm201 = vweird.f32 %v195
    %vm202 = vweird.f32 %v196
    %vm203 = vmor %vm201, %vm202
    %v204 = vsel %vm203, %v196, %v200
    %v205 = vand.u32 2147483647, %v195
    %vm206 = vcmp.eq.f32.partialorder %v205, 8.507059e+37
    %v207 = vand.u32 %v195, 2147483648
    %v208 = vor.u32 1.1754944e-38, %v207
    %v209 = vsel %vm206, %v208, %v204
    %v210 = vmul.f32 %v185, %v209
    %v211 = vmin.f32 %v210, 1.0
    %v212 = vmax.f32 %v211, -1.0
    %v213 = vadd.f32 %v172, 1.0
    %v214 = vadd.f32 %v212, 1.0
    %v215 = vmul.f32 %v129, %v213
    %v216 = vmul.f32 %v130, %v214
    %v217 = vld [vmem:[#allocation7] sm:$0xff]
    %v218 = vld [vmem:[#allocation7 + $0x8] sm:$0xff]
    %v219 = vld [vmem:[#allocation7 + $0x10] sm:$0xff]
    %v220 = vld [vmem:[#allocation7 + $0x18] sm:$0xff]
    %v221 = vld [vmem:[%s4] sm:$0x1]
    %v223 = vperm.slane %v221, 0
    %vm225 = vcmask 261120
    %v227 = vsel %vm225, %v215, 0
    %v230 = vsel %vm225, %v216, 0
    %232 = vmatpush.msra.mxu0 0.0
    %233 = vmatpush.msra.mxu0 0.0
    %234 = vmatpush.msra.mxu0 0.0
    %235 = vmatpush.msra.mxu0 0.0
    %236 = vmatpush.msra.mxu0 0.0
    %237 = vmatpush.msra.mxu0 0.0
    %238 = vmatpush.msra.mxu0 0.0
    %239 = vmatpush.msra.mxu0 0.0
    %240 = vmatpush.msra.mxu0 0.0
    %241 = vmatpush.msra.mxu0 0.0
    %242 = vmatpush.msra.mxu0 0.0
    %243 = vmatpush.msra.mxu0 0.0
    %244 = vmatpush.msra.mxu0 %v220
    %245 = vmatpush.msra.mxu0 %v219
    %246 = vmatpush.msra.mxu0 %v218
    %247 = vmatpush.msra.mxu0 %v217
    %248 = vmatmul.f32.gmra.mxu0 %v227
    %v249 = vpop.f32.mrf.mxu0
    %v250 = vadd.f32 %v223, %v249
    %251 = vmatmul.f32.gmra.mxu0 %v230
    %v252 = vpop.f32.mrf.mxu0
    %v253 = vadd.f32 %v223, %v252
    %254 = vdwg.mxu0
    %v255 = vmul.f32 %v250, 0.5
    %v256 = vmul.f32 %v253, 0.5
    %v257 = vmul.f32 %v250, 0.70710677
    %v258 = vmul.f32 %v253, 0.70710677
    %v259 = vmul.f32 %v257, %v257
    %v260 = vmin.f32 16.0, %v259
    %v261 = vmul.f32 %v260, 2.1237322e-06
    %v262 = vadd.f32 %v261, 0.00028619796
    %v263 = vmul.f32 %v260, %v262
    %v264 = vadd.f32 %v263, 0.0036580483
    %v265 = vmul.f32 %v260, %v264
    %v266 = vadd.f32 %v265, 0.05243302
    %v267 = vmul.f32 %v260, %v266
    %v268 = vadd.f32 %v267, 0.18741608
    %v269 = vmul.f32 %v260, %v268
    %v270 = vadd.f32 %v269, 1.1283791
    %v271 = vmul.f32 %v257, %v270
    %v272 = vmul.f32 %v260, 3.8918573e-05
    %v273 = vadd.f32 %v272, 0.001143296
    %v274 = vmul.f32 %v260, %v273
    %v275 = vadd.f32 %v274, 0.014752088
    %v276 = vmul.f32 %v260, %v275
    %v277 = vadd.f32 %v276, 0.112945676
    %v278 = vmul.f32 %v260, %v277
    %v279 = vadd.f32 %v278, 0.4994258
    %v280 = vmul.f32 %v260, %v279
    %v281 = vadd.f32 %v280, 1.0
    %v282 = vrcp.pop %v281
    %v283 = vmul.f32 %v281, %v282
    %v284 = vsub.f32 1.0, %v283
    %v285 = vmul.f32 %v282, %v284
    %v286 = vadd.f32 %v282, %v285
    %vm287 = vweird.f32 %v281
    %vm288 = vweird.f32 %v282
    %vm289 = vmor %vm287, %vm288
    %v290 = vsel %vm289, %v282, %v286
    %v291 = vand.u32 2147483647, %v281
    %vm292 = vcmp.eq.f32.partialorder %v291, 8.507059e+37
    %v293 = vand.u32 %v281, 2147483648
    %v294 = vor.u32 1.1754944e-38, %v293
    %v295 = vsel %vm292, %v294, %v290
    %v296 = vmul.f32 %v271, %v295
    %v297 = vmin.f32 %v296, 1.0
    %v298 = vmax.f32 %v297, -1.0
    %v299 = vmul.f32 %v258, %v258
    %v300 = vmin.f32 16.0, %v299
    %v301 = vmul.f32 %v300, 2.1237322e-06
    %v302 = vadd.f32 %v301, 0.00028619796
    %v303 = vmul.f32 %v300, %v302
    %v304 = vadd.f32 %v303, 0.0036580483
    %v305 = vmul.f32 %v300, %v304
    %v306 = vadd.f32 %v305, 0.05243302
    %v307 = vmul.f32 %v300, %v306
    %v308 = vadd.f32 %v307, 0.18741608
    %v309 = vmul.f32 %v300, %v308
    %v310 = vadd.f32 %v309, 1.1283791
    %v311 = vmul.f32 %v258, %v310
    %v312 = vmul.f32 %v300, 3.8918573e-05
    %v313 = vadd.f32 %v312, 0.001143296
    %v314 = vmul.f32 %v300, %v313
    %v315 = vadd.f32 %v314, 0.014752088
    %v316 = vmul.f32 %v300, %v315
    %v317 = vadd.f32 %v316, 0.112945676
    %v318 = vmul.f32 %v300, %v317
    %v319 = vadd.f32 %v318, 0.4994258
    %v320 = vmul.f32 %v300, %v319
    %v321 = vadd.f32 %v320, 1.0
    %v322 = vrcp.pop %v321
    %v323 = vmul.f32 %v321, %v322
    %v324 = vsub.f32 1.0, %v323
    %v325 = vmul.f32 %v322, %v324
    %v326 = vadd.f32 %v322, %v325
    %vm327 = vweird.f32 %v321
    %vm328 = vweird.f32 %v322
    %vm329 = vmor %vm327, %vm328
    %v330 = vsel %vm329, %v322, %v326
    %v331 = vand.u32 2147483647, %v321
    %vm332 = vcmp.eq.f32.partialorder %v331, 8.507059e+37
    %v333 = vand.u32 %v321, 2147483648
    %v334 = vor.u32 1.1754944e-38, %v333
    %v335 = vsel %vm332, %v334, %v330
    %v336 = vmul.f32 %v311, %v335
    %v337 = vmin.f32 %v336, 1.0
    %v338 = vmax.f32 %v337, -1.0
    %v339 = vadd.f32 %v298, 1.0
    %v340 = vadd.f32 %v338, 1.0
    %v341 = vmul.f32 %v255, %v339
    %v342 = vmul.f32 %v256, %v340
    %v343 = vld [vmem:[#allocation8] sm:$0xff]
    %v344 = vld [vmem:[#allocation8 + $0x8] sm:$0xff]
    %v345 = vld [vmem:[#allocation8 + $0x10] sm:$0xff]
    %v346 = vld [vmem:[#allocation8 + $0x18] sm:$0xff]
    %v347 = vld [vmem:[%s6] sm:$0x1]
    %v349 = vperm.slane %v347, 0
    %v352 = vsel %vm225, %v341, 0
    %v355 = vsel %vm225, %v342, 0
    %357 = vmatpush.msra.mxu0 0.0
    %358 = vmatpush.msra.mxu0 0.0
    %359 = vmatpush.msra.mxu0 0.0
    %360 = vmatpush.msra.mxu0 0.0
    %361 = vmatpush.msra.mxu0 0.0
    %362 = vmatpush.msra.mxu0 0.0
    %363 = vmatpush.msra.mxu0 0.0
    %364 = vmatpush.msra.mxu0 0.0
    %365 = vmatpush.msra.mxu0 0.0
    %366 = vmatpush.msra.mxu0 0.0
    %367 = vmatpush.msra.mxu0 0.0
    %368 = vmatpush.msra.mxu0 0.0
    %369 = vmatpush.msra.mxu0 %v346
    %370 = vmatpush.msra.mxu0 %v345
    %371 = vmatpush.msra.mxu0 %v344
    %372 = vmatpush.msra.mxu0 %v343
    %373 = vmatmul.f32.gmra.mxu0 %v352
    %v374 = vpop.f32.mrf.mxu0
    %v375 = vadd.f32 %v349, %v374
    %376 = vmatmul.f32.gmra.mxu0 %v355
    %v377 = vpop.f32.mrf.mxu0
    %v378 = vadd.f32 %v349, %v377
    %379 = vdwg.mxu0
    %380 = vst.msk [vmem:[#allocation10] sm:$0xff] %vm225, %v375
    %381 = vst.msk [vmem:[#allocation10 + $0x8] sm:$0xff] %vm225, %v378
    // Predicated region
    $region46: #{tpu_custom_call.1} parent=1 // pred_check
      _
    $region47: #{tpu_custom_call.1} parent=1 // pred_check_branch
      %383 = sbr.rel (0) target = $region49
    $region48: #{tpu_custom_call.1} parent=1 // pred_region
      %385 = vsyncadd [#allocation4], 0
      %s386 = sshll.u32 [#allocation10], 4
      %s387 = int_to_ptr.vmem [resolvable:$true] %s386
      %s388 = sshll.u32 %s7, 4
      %s389 = int_to_ptr.hbm [resolvable:$true] %s388
      %394 = dma.vmem_to_hbm [thread:$0]  %s387, 256, %s389, [#allocation4], 128, 128, 8
    $region49: #{tpu_custom_call.1} parent=1 // pred_fallthru
      _
    // Predicated region
    $region50: #{tpu_custom_call.1} parent=1 // pred_check
      _
    $region51: #{tpu_custom_call.1} parent=1 // pred_check_branch
      %396 = sbr.rel (0) target = $region53
    $region52: #{tpu_custom_call.1} parent=1 // pred_region
      %398 = dma.done [#allocation4], 256
    $region53: #{tpu_custom_call.1} parent=1 // pred_fallthru
      _
    %399 = vsyncpa [#allocation3], 1
    %400 = vsyncpa [#allocation6], 1
    %401 = vsyncpa [#allocation9], 1
    %402 = vsyncpa [#allocation4], 1

</llo_original>
